<compile_context>
chip_gen: v5e
topology: v5e:2x2
jax: 0.10.0
libtpu: 0.0.40
codegen_flags: <defaults>
</compile_context>

<pallas_src>
import functools

import jax
import jax.numpy as jnp
from jax import lax
from jax.experimental import pallas as pl
from jax.experimental.pallas import tpu as pltpu


def _elr_kernel(beta, lambda_, batch, block_b,
                # scalar prefetch
                idx_ref,                 # (Bp,) int32 in SMEM
                # inputs
                lbl_ref,                 # (TB, 1) int32 block
                logits_ref,              # (TB, C) native-dtype block
                tgt_hbm_in,              # (num_examp, C) f32, HBM (ANY)
                # outputs
                tgt_hbm_out,             # aliased with tgt_hbm_in (ANY)
                loss_ref,                # (1, 8, 128) f32 per-tile partial sum
                # scratch
                tgt_vmem,                # (TB, C) f32
                sem):                    # DMA semaphores, shape (2,)
    t = pl.program_id(0)
    C = logits_ref.shape[1]
    row0 = t * block_b
    n_valid = jnp.minimum(batch - row0, block_b)   # non-padded rows in this tile

    # ---- gather target[index[row]] rows into VMEM: issue all starts now -----
    @pl.loop(0, n_valid)
    def _(r):
        src = idx_ref[row0 + r]
        pltpu.make_async_copy(tgt_hbm_in.at[pl.ds(src, 1), :],
                              tgt_vmem.at[pl.ds(r, 1), :],
                              sem.at[0]).start()

    # ---- target-independent vector math (covers the gather latency) ---------
    logits = logits_ref[...].astype(jnp.float32)            # (TB, C)

    m = jnp.max(logits, axis=1, keepdims=True)
    e = jnp.exp(logits - m)
    s = jnp.sum(e, axis=1, keepdims=True)
    inv_s = pl.reciprocal(s)                                 # exact, one per row
    y_pred = jnp.clip(e * inv_s, 0.0001, 1.0 - 0.0001)

    inv_norm = pl.reciprocal(jnp.sum(y_pred, axis=1, keepdims=True))
    y_norm = y_pred * inv_norm

    # cross entropy on raw logits; label picked via iota == label mask
    lbl = lbl_ref[...]                                       # (TB, 1) int32
    cls = lax.broadcasted_iota(jnp.int32, (block_b, C), 1)
    log_sm = (logits - m) - jnp.log(s)
    ce = -jnp.sum(jnp.where(cls == lbl, log_sm, 0.0), axis=1, keepdims=True)

    rows = lax.broadcasted_iota(jnp.int32, (block_b, 1), 0)
    row_mask = rows < n_valid                                 # (TB, 1) bool

    # ---- now wait for the gathers (descriptor only needs matching sizes) ----
    @pl.loop(0, n_valid)
    def _(r):
        pltpu.make_async_copy(tgt_hbm_in.at[pl.ds(0, 1), :],
                              tgt_vmem.at[pl.ds(r, 1), :],
                              sem.at[0]).wait()

    # mask out stale VMEM on padded rows before using it
    tgt_old = jnp.where(row_mask, tgt_vmem[...], 0.0)         # (TB, C)
    new_tgt = beta * tgt_old + (1.0 - beta) * y_norm
    tgt_vmem[...] = new_tgt

    # ---- scatter updated rows back into the aliased target buffer -----------
    # starts issued before the epilogue math so the write-back overlaps it
    @pl.loop(0, n_valid)
    def _(r):
        dst = idx_ref[row0 + r]
        pltpu.make_async_copy(tgt_vmem.at[pl.ds(r, 1), :],
                              tgt_hbm_out.at[pl.ds(dst, 1), :],
                              sem.at[1]).start()

    # elr_reg = log(1 - <target_new, y_pred>)   (clamp keeps the arg positive)
    dot = jnp.sum(new_tgt * y_pred, axis=1, keepdims=True)
    elr = jnp.log(jnp.maximum(1.0 - dot, 1e-8))

    per_row = jnp.where(row_mask, ce + lambda_ * elr, 0.0)
    partial = jnp.sum(per_row)
    loss_ref[...] = jnp.zeros((1, 8, 128), jnp.float32) + partial

    @pl.loop(0, n_valid)
    def _(r):
        pltpu.make_async_copy(tgt_vmem.at[pl.ds(r, 1), :],
                              tgt_hbm_out.at[pl.ds(0, 1), :],
                              sem.at[1]).wait()


def _round_up(x, m):
    return (x + m - 1) // m * m


def _pick_tile(B, C, logit_bytes, block_b):
    """Tile size: >= 2 'parallel' tiles when possible (v7x has 2 TensorCores),
    clamped so the per-tile VMEM footprint stays well under the smallest
    default scoped-VMEM budget (v5e 16 MiB / v7x 32 MiB)."""
    tb = max(8, min(block_b, _round_up(pl.cdiv(B, 2), 8)))
    cp = _round_up(C, 128)                       # lane padding in VMEM
    budget = 12 * 1024 * 1024

    def footprint(t):
        # logits double-buffer + f32 target scratch + f32 working slack
        return t * cp * (2 * logit_bytes + 3 * 4)

    while tb > 8 and footprint(tb) > budget:
        tb = _round_up(tb // 2, 8)
    return tb


@functools.partial(jax.jit,
                   static_argnames=("beta", "lambda_", "block_b"),
                   donate_argnums=(3,))
def elr_loss_pallas(index, output, label, target, *, beta=0.7, lambda_=0.3,
                    block_b=128):
    """Fused ELR loss. Returns (final_loss, updated_target).

    `target` is donated and updated in place (only the B selected rows are
    touched); the returned array is the persistent buffer for the next step.
    """
    B, C = output.shape
    num_examp = target.shape[0]
    target = target.astype(jnp.float32)

    tb = _pick_tile(B, C, output.dtype.itemsize, block_b)
    num_tiles = pl.cdiv(B, tb)
    bp = num_tiles * tb

    index = index.astype(jnp.int32)
    label2d = label.astype(jnp.int32).reshape(B, 1)
    if bp != B:                                   # pad batch to a tile multiple
        output = jnp.pad(output, ((0, bp - B), (0, 0)))
        label2d = jnp.pad(label2d, ((0, bp - B), (0, 0)))
        index = jnp.pad(index, (0, bp - B))

    kernel = functools.partial(_elr_kernel, float(beta), float(lambda_), B, tb)

    grid_spec = pltpu.PrefetchScalarGridSpec(
        num_scalar_prefetch=1,                    # index -> SMEM
        grid=(num_tiles,),
        in_specs=[
            pl.BlockSpec((tb, 1), lambda t, idx: (t, 0)),   # labels
            pl.BlockSpec((tb, C), lambda t, idx: (t, 0)),   # logits, native dtype
            pl.BlockSpec(memory_space=pl.ANY),              # target (HBM)
        ],
        out_specs=(
            pl.BlockSpec(memory_space=pl.ANY),              # updated target
            pl.BlockSpec((1, 8, 128), lambda t, idx: (t, 0, 0)),  # loss partials
        ),
        scratch_shapes=[
            pltpu.VMEM((tb, C), jnp.float32),
            pltpu.SemaphoreType.DMA((2,)),
        ],
    )

    new_target, partials = pl.pallas_call(
        kernel,
        grid_spec=grid_spec,
        out_shape=(
            jax.ShapeDtypeStruct((num_examp, C), jnp.float32),
            jax.ShapeDtypeStruct((num_tiles, 8, 128), jnp.float32),
        ),
        # operands: 0=index (scalar prefetch), 1=labels, 2=logits, 3=target
        input_output_aliases={3: 0},
        compiler_params=pltpu.CompilerParams(
            dimension_semantics=("parallel",),
        ),
    )(index, label2d, output, target)

    loss = jnp.sum(partials[:, 0, 0]) / B
    return loss, new_target


def elr_loss_ref(index, output, label, target, *, beta=0.7, lambda_=0.3):
    """Pure-JAX reference mirroring the PyTorch forward."""
    y_pred = jax.nn.softmax(output, axis=1)
    y_pred = jnp.clip(y_pred, 0.0001, 1.0 - 0.0001)
    y_norm = y_pred / jnp.sum(y_pred, axis=1, keepdims=True)
    new_rows = beta * target[index] + (1.0 - beta) * y_norm
    new_target = target.at[index].set(new_rows)
    log_softmax = jax.nn.log_softmax(output, axis=1)
    ce = -jnp.mean(jnp.take_along_axis(log_softmax, label[:, None], axis=1))
    elr = jnp.mean(jnp.log(1.0 - jnp.sum(new_rows * y_pred, axis=1)))
    return ce + lambda_ * elr, new_target


if __name__ == "__main__":
    num_examp = 32
    num_classes = 10
    B = 13          # not a multiple of the tile -> exercises padding + 2 tiles

    key = jax.random.PRNGKey(0)
    k1, k2, k3, k4 = jax.random.split(key, 4)

    output = jax.random.normal(k1, (B, num_classes), dtype=jnp.float32) * 2.0
    label = jax.random.randint(k2, (B,), 0, num_classes, dtype=jnp.int32)
    index = jax.random.permutation(k3, num_examp)[:B].astype(jnp.int32)
    # persistent target buffer (module starts at zeros; nonzero state here so
    # the EMA path is exercised)
    target = jax.nn.softmax(
        jax.random.normal(k4, (num_examp, num_classes), dtype=jnp.float32),
        axis=1,
    ) * 0.5

    # compute the pure-JAX reference first: the pallas path donates `target`
    loss_ref_v, new_target_ref = elr_loss_ref(index, output, label, target)
    loss_ref_v = jax.block_until_ready(loss_ref_v)
    new_target_ref = jax.block_until_ready(new_target_ref)

    loss, new_target = elr_loss_pallas(index, output, label, target)
    loss = jax.block_until_ready(loss)
    new_target = jax.block_until_ready(new_target)

    assert jnp.allclose(loss, loss_ref_v, atol=1e-5, rtol=1e-5), (loss, loss_ref_v)
    assert jnp.allclose(new_target, new_target_ref, atol=1e-5, rtol=1e-5)

    print("KERNEL_OK")
</pallas_src>

<mosaic_0001>
module attributes {stable_mosaic.version = 11 : i64} {
  func.func @_elr_kernel(%arg0: i32, %arg1: memref<16xi32, #tpu.memory_space<smem>>, %arg2: memref<8x1xi32, #tpu.memory_space<vmem>>, %arg3: memref<8x10xf32, #tpu.memory_space<vmem>>, %arg4: memref<32x10xf32, #tpu.memory_space<any>>, %arg5: memref<32x10xf32, #tpu.memory_space<any>>, %arg6: memref<1x8x128xf32, #tpu.memory_space<vmem>>, %arg7: memref<8x10xf32, #tpu.memory_space<vmem>>, %arg8: memref<2x!tpu.dma_semaphore, #tpu.memory_space<semaphore_mem>>) attributes {dimension_semantics = [#tpu.dimension_semantics<parallel>], iteration_bounds = array<i64: 2>, scalar_prefetch = 1 : i64, scratch_operands = 2 : i64, tpu.core_type = #tpu.core_type<tc>, window_params = [{transform_indices = @transform_0, window_bounds = array<i64: 8, 1>}, {transform_indices = @transform_1, window_bounds = array<i64: 8, 10>}, {}, {}, {transform_indices = @transform_4, window_bounds = array<i64: 1, 8, 128>}]} {
    %c8_i32 = arith.constant 8 : i32
    %0 = arith.muli %arg0, %c8_i32 : i32
    %c13_i32 = arith.constant 13 : i32
    %1 = arith.subi %c13_i32, %0 : i32
    %c8_i32_0 = arith.constant 8 : i32
    %2 = arith.minsi %1, %c8_i32_0 : i32
    %c0_i32 = arith.constant 0 : i32
    %3 = arith.subi %2, %c0_i32 : i32
    %c1_i32 = arith.constant 1 : i32
    %c1_i32_1 = arith.constant 1 : i32
    %4 = arith.subi %c1_i32, %c1_i32_1 : i32
    %5 = arith.addi %3, %4 : i32
    %c1_i32_2 = arith.constant 1 : i32
    %6 = arith.divsi %5, %c1_i32_2 : i32
    %c1_i32_3 = arith.constant 1 : i32
    %c0_i32_4 = arith.constant 0 : i32
    %c0_i32_5 = arith.constant 0 : i32
    %7 = arith.subi %6, %c0_i32_5 : i32
    %8 = arith.addi %c0_i32_5, %7 : i32
    %c1_i32_6 = arith.constant 1 : i32
    scf.for %arg9 = %c0_i32_5 to %8 step %c1_i32_6  : i32 {
      %97 = arith.muli %arg9, %c1_i32_3 : i32
      %98 = arith.addi %c0_i32_4, %97 : i32
      %99 = arith.addi %0, %98 : i32
      %100 = arith.index_cast %99 : i32 to index
      %101 = memref.load %arg1[%100] : memref<16xi32, #tpu.memory_space<smem>>
      %c0_i32_58 = arith.constant 0 : i32
      %c0_i32_59 = arith.constant 0 : i32
      %102 = tpu.memref_slice %arg4[%101, %c0_i32_59] : memref<32x10xf32, #tpu.memory_space<any>> -> memref<1x10xf32, #tpu.memory_space<any>>
      %c0_i32_60 = arith.constant 0 : i32
      %103 = tpu.memref_slice %arg7[%98, %c0_i32_60] : memref<8x10xf32, #tpu.memory_space<vmem>> -> memref<1x10xf32, #tpu.memory_space<vmem>>
      %104 = tpu.memref_slice %arg8[%c0_i32_58] : memref<2x!tpu.dma_semaphore, #tpu.memory_space<semaphore_mem>> -> memref<1x!tpu.dma_semaphore, #tpu.memory_space<semaphore_mem>>
      %105 = tpu.memref_squeeze %104 : memref<1x!tpu.dma_semaphore, #tpu.memory_space<semaphore_mem>> -> memref<!tpu.dma_semaphore, #tpu.memory_space<semaphore_mem>>
      tpu.enqueue_dma source(%102 : memref<1x10xf32, #tpu.memory_space<any>>) target(%103 : memref<1x10xf32, #tpu.memory_space<vmem>>) target_semaphore(%105 : memref<!tpu.dma_semaphore, #tpu.memory_space<semaphore_mem>>)
    }
    %c0 = arith.constant 0 : index
    %c0_7 = arith.constant 0 : index
    %9 = vector.load %arg3[%c0, %c0_7] : memref<8x10xf32, #tpu.memory_space<vmem>>, vector<8x10xf32>
    %cst = arith.constant dense<0xFF800000> : vector<8xf32>
    %10 = vector.multi_reduction <maximumf>, %9, %cst [1] : vector<8x10xf32> to vector<8xf32>
    %11 = vector.shape_cast %10 : vector<8xf32> to vector<8x1xf32>
    %12 = vector.broadcast %11 : vector<8x1xf32> to vector<8x10xf32>
    %13 = arith.subf %9, %12 : vector<8x10xf32>
    %14 = math.exp %13 : vector<8x10xf32>
    %cst_8 = arith.constant dense<0.000000e+00> : vector<8xf32>
    %15 = vector.multi_reduction <add>, %14, %cst_8 [1] : vector<8x10xf32> to vector<8xf32>
    %16 = vector.shape_cast %15 : vector<8xf32> to vector<8x1xf32>
    %17 = tpu.reciprocal %16 : vector<8x1xf32> -> vector<8x1xf32>
    %18 = vector.broadcast %17 : vector<8x1xf32> to vector<8x10xf32>
    %19 = arith.mulf %14, %18 : vector<8x10xf32>
    %cst_9 = arith.constant 9.99999974E-5 : f32
    %cst_10 = arith.constant 0.999899983 : f32
    %20 = vector.broadcast %cst_9 : f32 to vector<8x10xf32>
    %21 = arith.maximumf %20, %19 : vector<8x10xf32>
    %22 = vector.broadcast %cst_10 : f32 to vector<8x10xf32>
    %23 = arith.minimumf %22, %21 : vector<8x10xf32>
    %cst_11 = arith.constant dense<0.000000e+00> : vector<8xf32>
    %24 = vector.multi_reduction <add>, %23, %cst_11 [1] : vector<8x10xf32> to vector<8xf32>
    %25 = vector.shape_cast %24 : vector<8xf32> to vector<8x1xf32>
    %26 = tpu.reciprocal %25 : vector<8x1xf32> -> vector<8x1xf32>
    %27 = vector.broadcast %26 : vector<8x1xf32> to vector<8x10xf32>
    %28 = arith.mulf %23, %27 : vector<8x10xf32>
    %c0_12 = arith.constant 0 : index
    %c0_13 = arith.constant 0 : index
    %29 = vector.load %arg2[%c0_12, %c0_13] : memref<8x1xi32, #tpu.memory_space<vmem>>, vector<8x1xi32>
    %30 = tpu.iota {dimensions = array<i32: 1>} : vector<8x10xi32>
    %31 = vector.broadcast %11 : vector<8x1xf32> to vector<8x10xf32>
    %32 = arith.subf %9, %31 : vector<8x10xf32>
    %33 = math.log %16 : vector<8x1xf32>
    %34 = vector.broadcast %33 : vector<8x1xf32> to vector<8x10xf32>
    %35 = arith.subf %32, %34 : vector<8x10xf32>
    %36 = vector.broadcast %29 : vector<8x1xi32> to vector<8x10xi32>
    %37 = arith.cmpi eq, %30, %36 : vector<8x10xi32>
    %cst_14 = arith.constant 0.000000e+00 : f32
    %38 = vector.broadcast %cst_14 : f32 to vector<8x10xf32>
    %39 = arith.select %37, %35, %38 : vector<8x10xi1>, vector<8x10xf32>
    %cst_15 = arith.constant dense<0.000000e+00> : vector<8xf32>
    %40 = vector.multi_reduction <add>, %39, %cst_15 [1] : vector<8x10xf32> to vector<8xf32>
    %41 = vector.shape_cast %40 : vector<8xf32> to vector<8x1xf32>
    %cst_16 = arith.constant 0.000000e+00 : f32
    %42 = vector.broadcast %cst_16 : f32 to vector<8x1xf32>
    %43 = arith.subf %42, %41 : vector<8x1xf32>
    %44 = tpu.iota {dimensions = array<i32: 0>} : vector<8x1xi32>
    %45 = vector.broadcast %2 : i32 to vector<8x1xi32>
    %46 = arith.cmpi slt, %44, %45 : vector<8x1xi32>
    %c0_i32_17 = arith.constant 0 : i32
    %47 = arith.subi %2, %c0_i32_17 : i32
    %c1_i32_18 = arith.constant 1 : i32
    %c1_i32_19 = arith.constant 1 : i32
    %48 = arith.subi %c1_i32_18, %c1_i32_19 : i32
    %49 = arith.addi %47, %48 : i32
    %c1_i32_20 = arith.constant 1 : i32
    %50 = arith.divsi %49, %c1_i32_20 : i32
    %c1_i32_21 = arith.constant 1 : i32
    %c0_i32_22 = arith.constant 0 : i32
    %c0_i32_23 = arith.constant 0 : i32
    %51 = arith.subi %50, %c0_i32_23 : i32
    %52 = arith.addi %c0_i32_23, %51 : i32
    %c1_i32_24 = arith.constant 1 : i32
    scf.for %arg9 = %c0_i32_23 to %52 step %c1_i32_24  : i32 {
      %97 = arith.muli %arg9, %c1_i32_21 : i32
      %98 = arith.addi %c0_i32_22, %97 : i32
      %c0_i32_58 = arith.constant 0 : i32
      %c0_i32_59 = arith.constant 0 : i32
      %c0_i32_60 = arith.constant 0 : i32
      %99 = tpu.memref_slice %arg4[%c0_i32_59, %c0_i32_60] : memref<32x10xf32, #tpu.memory_space<any>> -> memref<1x10xf32, #tpu.memory_space<any>>
      %c0_i32_61 = arith.constant 0 : i32
      %100 = tpu.memref_slice %arg7[%98, %c0_i32_61] : memref<8x10xf32, #tpu.memory_space<vmem>> -> memref<1x10xf32, #tpu.memory_space<vmem>>
      %101 = tpu.memref_slice %arg8[%c0_i32_58] : memref<2x!tpu.dma_semaphore, #tpu.memory_space<semaphore_mem>> -> memref<1x!tpu.dma_semaphore, #tpu.memory_space<semaphore_mem>>
      %102 = tpu.memref_squeeze %101 : memref<1x!tpu.dma_semaphore, #tpu.memory_space<semaphore_mem>> -> memref<!tpu.dma_semaphore, #tpu.memory_space<semaphore_mem>>
      tpu.wait_dma2 semaphore(%102 : memref<!tpu.dma_semaphore, #tpu.memory_space<semaphore_mem>>) src(%99 : memref<1x10xf32, #tpu.memory_space<any>>) dst(%100 : memref<1x10xf32, #tpu.memory_space<vmem>>)
    }
    %c0_25 = arith.constant 0 : index
    %c0_26 = arith.constant 0 : index
    %53 = vector.load %arg7[%c0_25, %c0_26] : memref<8x10xf32, #tpu.memory_space<vmem>>, vector<8x10xf32>
    %cst_27 = arith.constant 0.000000e+00 : f32
    %54 = vector.shape_cast %46 : vector<8x1xi1> to vector<8x1xi1>
    %55 = vector.broadcast %54 : vector<8x1xi1> to vector<8x10xi1>
    %56 = vector.broadcast %cst_27 : f32 to vector<8x10xf32>
    %57 = arith.select %55, %53, %56 : vector<8x10xi1>, vector<8x10xf32>
    %cst_28 = arith.constant 0.699999988 : f32
    %58 = vector.broadcast %cst_28 : f32 to vector<8x10xf32>
    %59 = arith.mulf %58, %57 : vector<8x10xf32>
    %cst_29 = arith.constant 3.000000e-01 : f32
    %60 = vector.broadcast %cst_29 : f32 to vector<8x10xf32>
    %61 = arith.mulf %60, %28 : vector<8x10xf32>
    %62 = arith.addf %59, %61 : vector<8x10xf32>
    %c0_30 = arith.constant 0 : index
    %c0_31 = arith.constant 0 : index
    %63 = vector.load %arg7[%c0_30, %c0_31] : memref<8x10xf32, #tpu.memory_space<vmem>>, vector<8x10xf32>
    tpu.vector_store %arg7[%c0_30, %c0_31], %62 {strides = array<i32>} : memref<8x10xf32, #tpu.memory_space<vmem>>, vector<8x10xf32>,
    %c0_i32_32 = arith.constant 0 : i32
    %64 = arith.subi %2, %c0_i32_32 : i32
    %c1_i32_33 = arith.constant 1 : i32
    %c1_i32_34 = arith.constant 1 : i32
    %65 = arith.subi %c1_i32_33, %c1_i32_34 : i32
    %66 = arith.addi %64, %65 : i32
    %c1_i32_35 = arith.constant 1 : i32
    %67 = arith.divsi %66, %c1_i32_35 : i32
    %c1_i32_36 = arith.constant 1 : i32
    %c0_i32_37 = arith.constant 0 : i32
    %c0_i32_38 = arith.constant 0 : i32
    %68 = arith.subi %67, %c0_i32_38 : i32
    %69 = arith.addi %c0_i32_38, %68 : i32
    %c1_i32_39 = arith.constant 1 : i32
    scf.for %arg9 = %c0_i32_38 to %69 step %c1_i32_39  : i32 {
      %97 = arith.muli %arg9, %c1_i32_36 : i32
      %98 = arith.addi %c0_i32_37, %97 : i32
      %99 = arith.addi %0, %98 : i32
      %100 = arith.index_cast %99 : i32 to index
      %101 = memref.load %arg1[%100] : memref<16xi32, #tpu.memory_space<smem>>
      %c1_i32_58 = arith.constant 1 : i32
      %c0_i32_59 = arith.constant 0 : i32
      %102 = tpu.memref_slice %arg7[%98, %c0_i32_59] : memref<8x10xf32, #tpu.memory_space<vmem>> -> memref<1x10xf32, #tpu.memory_space<vmem>>
      %c0_i32_60 = arith.constant 0 : i32
      %103 = tpu.memref_slice %arg5[%101, %c0_i32_60] : memref<32x10xf32, #tpu.memory_space<any>> -> memref<1x10xf32, #tpu.memory_space<any>>
      %104 = tpu.memref_slice %arg8[%c1_i32_58] : memref<2x!tpu.dma_semaphore, #tpu.memory_space<semaphore_mem>> -> memref<1x!tpu.dma_semaphore, #tpu.memory_space<semaphore_mem>>
      %105 = tpu.memref_squeeze %104 : memref<1x!tpu.dma_semaphore, #tpu.memory_space<semaphore_mem>> -> memref<!tpu.dma_semaphore, #tpu.memory_space<semaphore_mem>>
      tpu.enqueue_dma source(%102 : memref<1x10xf32, #tpu.memory_space<vmem>>) target(%103 : memref<1x10xf32, #tpu.memory_space<any>>) target_semaphore(%105 : memref<!tpu.dma_semaphore, #tpu.memory_space<semaphore_mem>>)
    }
    %70 = arith.mulf %62, %23 : vector<8x10xf32>
    %cst_40 = arith.constant dense<0.000000e+00> : vector<8xf32>
    %71 = vector.multi_reduction <add>, %70, %cst_40 [1] : vector<8x10xf32> to vector<8xf32>
    %72 = vector.shape_cast %71 : vector<8xf32> to vector<8x1xf32>
    %cst_41 = arith.constant 1.000000e+00 : f32
    %73 = vector.broadcast %cst_41 : f32 to vector<8x1xf32>
    %74 = arith.subf %73, %72 : vector<8x1xf32>
    %cst_42 = arith.constant 9.99999993E-9 : f32
    %75 = vector.broadcast %cst_42 : f32 to vector<8x1xf32>
    %76 = arith.maximumf %74, %75 : vector<8x1xf32>
    %77 = math.log %76 : vector<8x1xf32>
    %cst_43 = arith.constant 3.000000e-01 : f32
    %78 = vector.broadcast %cst_43 : f32 to vector<8x1xf32>
    %79 = arith.mulf %78, %77 : vector<8x1xf32>
    %80 = arith.addf %43, %79 : vector<8x1xf32>
    %cst_44 = arith.constant 0.000000e+00 : f32
    %81 = vector.broadcast %cst_44 : f32 to vector<8x1xf32>
    %82 = arith.select %46, %80, %81 : vector<8x1xi1>, vector<8x1xf32>
    %83 = vector.shape_cast %82 : vector<8x1xf32> to vector<1x8x1xf32>
    %cst_45 = arith.constant dense<0.000000e+00> : vector<1xf32>
    %84 = vector.multi_reduction <add>, %83, %cst_45 [1, 2] : vector<1x8x1xf32> to vector<1xf32>
    %85 = vector.shape_cast %84 : vector<1xf32> to vector<1x1x1xf32>
    %86 = vector.extract %85[0, 0, 0] : f32 from vector<1x1x1xf32>
    %cst_46 = arith.constant 0.000000e+00 : f32
    %87 = vector.broadcast %cst_46 : f32 to vector<1x8x128xf32>
    %88 = vector.broadcast %86 : f32 to vector<1x8x128xf32>
    %89 = arith.addf %87, %88 : vector<1x8x128xf32>
    %c0_47 = arith.constant 0 : index
    %c0_48 = arith.constant 0 : index
    %c0_49 = arith.constant 0 : index
    %90 = vector.load %arg6[%c0_47, %c0_48, %c0_49] : memref<1x8x128xf32, #tpu.memory_space<vmem>>, vector<1x8x128xf32>
    tpu.vector_store %arg6[%c0_47, %c0_48, %c0_49], %89 {strides = array<i32>} : memref<1x8x128xf32, #tpu.memory_space<vmem>>, vector<1x8x128xf32>,
    %c0_i32_50 = arith.constant 0 : i32
    %91 = arith.subi %2, %c0_i32_50 : i32
    %c1_i32_51 = arith.constant 1 : i32
    %c1_i32_52 = arith.constant 1 : i32
    %92 = arith.subi %c1_i32_51, %c1_i32_52 : i32
    %93 = arith.addi %91, %92 : i32
    %c1_i32_53 = arith.constant 1 : i32
    %94 = arith.divsi %93, %c1_i32_53 : i32
    %c1_i32_54 = arith.constant 1 : i32
    %c0_i32_55 = arith.constant 0 : i32
    %c0_i32_56 = arith.constant 0 : i32
    %95 = arith.subi %94, %c0_i32_56 : i32
    %96 = arith.addi %c0_i32_56, %95 : i32
    %c1_i32_57 = arith.constant 1 : i32
    scf.for %arg9 = %c0_i32_56 to %96 step %c1_i32_57  : i32 {
      %97 = arith.muli %arg9, %c1_i32_54 : i32
      %98 = arith.addi %c0_i32_55, %97 : i32
      %c1_i32_58 = arith.constant 1 : i32
      %c0_i32_59 = arith.constant 0 : i32
      %99 = tpu.memref_slice %arg7[%98, %c0_i32_59] : memref<8x10xf32, #tpu.memory_space<vmem>> -> memref<1x10xf32, #tpu.memory_space<vmem>>
      %c0_i32_60 = arith.constant 0 : i32
      %c0_i32_61 = arith.constant 0 : i32
      %100 = tpu.memref_slice %arg5[%c0_i32_60, %c0_i32_61] : memref<32x10xf32, #tpu.memory_space<any>> -> memref<1x10xf32, #tpu.memory_space<any>>
      %101 = tpu.memref_slice %arg8[%c1_i32_58] : memref<2x!tpu.dma_semaphore, #tpu.memory_space<semaphore_mem>> -> memref<1x!tpu.dma_semaphore, #tpu.memory_space<semaphore_mem>>
      %102 = tpu.memref_squeeze %101 : memref<1x!tpu.dma_semaphore, #tpu.memory_space<semaphore_mem>> -> memref<!tpu.dma_semaphore, #tpu.memory_space<semaphore_mem>>
      tpu.wait_dma2 semaphore(%102 : memref<!tpu.dma_semaphore, #tpu.memory_space<semaphore_mem>>) src(%99 : memref<1x10xf32, #tpu.memory_space<vmem>>) dst(%100 : memref<1x10xf32, #tpu.memory_space<any>>)
    }
    return
  }
  func.func @transform_0(%arg0: i32, %arg1: memref<16xi32, #tpu.memory_space<smem>>) -> (i32, i32) {
    %c0_i32 = arith.constant 0 : i32
    %c0_i32_0 = arith.constant 0 : i32
    return %arg0, %c0_i32 : i32, i32
  }
  func.func @transform_1(%arg0: i32, %arg1: memref<16xi32, #tpu.memory_space<smem>>) -> (i32, i32) {
    %c0_i32 = arith.constant 0 : i32
    %c0_i32_0 = arith.constant 0 : i32
    return %arg0, %c0_i32 : i32, i32
  }
  func.func @transform_4(%arg0: i32, %arg1: memref<16xi32, #tpu.memory_space<smem>>) -> (i32, i32, i32) {
    %c0_i32 = arith.constant 0 : i32
    %c0_i32_0 = arith.constant 0 : i32
    %c0_i32_1 = arith.constant 0 : i32
    return %arg0, %c0_i32, %c0_i32_0 : i32, i32, i32
  }
}

</mosaic_0001>

<llo_original>
// kernel: elr_loss_pallas.1
$region0: #{elr_loss_pallas.1}
  #allocation0 [shape = 'u32[]', space=smem, size = 0x4, offset = 0x4, fixed_abs, tag = 'smem constant byte address 0x4 - core index']
  #allocation1 [shape = 'u32[72,128]{1,0:T(1,128)}', space=vmem, size = 0x9000, scoped, tag = 'internal scratch']
  #allocation2 [shape = 'f32[8,10]{1,0:T(8,128)}', space=vmem, size = 0x1000, scoped, tag = 'scratch operand']
  #allocation3 [shape = 's32[2]{0}', space=sflag, size = 0x8, scoped, tag = 'scratch operand']
  #allocation4 [shape = 's32[1]{0}', space=sflag, size = 0x4, scoped, tag = 'scoped memory for elr_loss_pallas.1']
  #allocation5 [shape = 'u8[512]{0}', space=smem, size = 0x200, scoped, tag = 'prefetched SMEM operand 0']
  #allocation6 [shape = 's32[]', space=sflag, size = 0x4, offset = 0, fixed_abs, tag = 'sflag constant byte address 0x0 - dummy sync flag']
  #allocation7 [shape = 's32[]', space=sflag, size = 0x4, offset = 0, fixed_abs, tag = 'sflag constant byte address 0x0 - dummy sync flag']
  %s0 = inlined_call_operand.vmem [shape: s32[16], index: 0, kind: input, shape index: {}]
  %s1 = inlined_call_operand.vmem [shape: s32[16,1], index: 1, kind: input, shape index: {}]
  %s2 = inlined_call_operand.vmem [shape: f32[16,10], index: 2, kind: input, shape index: {}]
  %s3 = inlined_call_operand.vmem [shape: f32[32,10], index: 3, kind: input, shape index: {}, may-alias: {3,4}]
  %s4 = inlined_call_operand.vmem [shape: f32[32,10], index: 4, kind: output, shape index: {0}, may-alias: {3,4}]
  %s5 = inlined_call_operand.vmem [shape: f32[2,8,128], index: 5, kind: output, shape index: {1}]
  %6 = xla_tuple %s4, %s5
  %s7 = sld [smem:[#allocation0]]
  $region129: #{elr_loss_pallas.1} parent=0
    _
  %s9 = ssub.s32 1, %s7
  %s10 = scalar_select 0, %s9, %s7
  %s12 = sshll.u32 %s0, 4
  %s13 = int_to_ptr.vmem [resolvable:$true] %s12
  %15 = dma.vmem_to_smem %s13, 16, [#allocation5], [#allocation4]
  %17 = dma.done [#allocation4], 16
  %18 = sfence
  loop: start=0, step=1, limit=4
  $region2: #{elr_loss_pallas.1} parent=0 // loop_pre_header
    _
  $region3: #{elr_loss_pallas.1} parent=0 // loop_header
    %s20 = sphi 0, %s24
    %p21 = scmp.ge.s32.totalorder %s20, 4
    %s30 = sphi 0, %s32
    %s33 = sphi 0, %s30
    %s34 = sphi 0, %s33
    %s50 = sphi 0, %s34
    %s56 = sphi 0, %s58
    %s59 = sphi 0, %s56
    %s60 = sphi 0, %s59
    %s76 = sphi 0, %s60
    %s82 = sphi 0, %s84
    %s85 = sphi 0, %s82
    %s86 = sphi 0, %s85
    %s102 = sphi 0, %s86
  $region4: #{elr_loss_pallas.1} parent=0 // loop_header_branch
    %23 = sbr.rel (%p21) target = $region8
  $region5: #{elr_loss_pallas.1} parent=0 // loop_body
    %s25 = ssub.s32 %s20, 1
    %s26 = ssub.s32 %s20, 2
    %s27 = sadd.s32 %s20, 1
    %s28 = ssub.s32 %s20, %s27
    %p29 = scmp.eq.s32.totalorder %s28, 0
    %s31 = sadd.s32 %s30, 1
    %s32 = scalar_select %p29, %s30, %s31
    %p35 = pneg %p29
    %p36 = scmp.eq.s32.totalorder %s20, 1
    %p37 = por %p35, %p36
    %p38 = scmp.ne.s32.totalorder %s30, %s33
    %p39 = scmp.eq.s32.totalorder %s20, 0
    %p40 = por %p38, %p39
    %p41 = scmp.ne.s32.totalorder %s30, %s33
    %p42 = scmp.eq.s32.totalorder %s25, 1
    %p43 = por %p41, %p42
    %p44 = scmp.ne.s32.totalorder %s33, %s34
    %p45 = scmp.eq.s32.totalorder %s25, 0
    %p46 = por %p44, %p45
    %p47 = scmp.ne.s32.totalorder %s33, %s34
    %p48 = scmp.eq.s32.totalorder %s26, 1
    %p49 = por %p47, %p48
    %p51 = scmp.ne.s32.totalorder %s34, %s50
    %p52 = scmp.eq.s32.totalorder %s26, 0
    %p53 = por %p51, %p52
    %s54 = ssub.s32 %s20, %s27
    %p55 = scmp.eq.s32.totalorder %s54, 0
    %s57 = sadd.s32 %s56, 1
    %s58 = scalar_select %p55, %s56, %s57
    %p61 = pneg %p55
    %p62 = scmp.eq.s32.totalorder %s20, 1
    %p63 = por %p61, %p62
    %p64 = scmp.ne.s32.totalorder %s56, %s59
    %p65 = scmp.eq.s32.totalorder %s20, 0
    %p66 = por %p64, %p65
    %p67 = scmp.ne.s32.totalorder %s56, %s59
    %p68 = scmp.eq.s32.totalorder %s25, 1
    %p69 = por %p67, %p68
    %p70 = scmp.ne.s32.totalorder %s59, %s60
    %p71 = scmp.eq.s32.totalorder %s25, 0
    %p72 = por %p70, %p71
    %p73 = scmp.ne.s32.totalorder %s59, %s60
    %p74 = scmp.eq.s32.totalorder %s26, 1
    %p75 = por %p73, %p74
    %p77 = scmp.ne.s32.totalorder %s60, %s76
    %p78 = scmp.eq.s32.totalorder %s26, 0
    %p79 = por %p77, %p78
    %s80 = ssub.s32 %s20, %s27
    %p81 = scmp.eq.s32.totalorder %s80, 0
    %s83 = sadd.s32 %s82, 1
    %s84 = scalar_select %p81, %s82, %s83
    %p87 = pneg %p81
    %p88 = scmp.eq.s32.totalorder %s20, 1
    %p89 = por %p87, %p88
    %p90 = scmp.ne.s32.totalorder %s82, %s85
    %p91 = scmp.eq.s32.totalorder %s20, 0
    %p92 = por %p90, %p91
    %p93 = scmp.ne.s32.totalorder %s82, %s85
    %p94 = scmp.eq.s32.totalorder %s25, 1
    %p95 = por %p93, %p94
    %p96 = scmp.ne.s32.totalorder %s85, %s86
    %p97 = scmp.eq.s32.totalorder %s25, 0
    %p98 = por %p96, %p97
    %p99 = scmp.ne.s32.totalorder %s85, %s86
    %p100 = scmp.eq.s32.totalorder %s26, 1
    %p101 = por %p99, %p100
    %p103 = scmp.ne.s32.totalorder %s86, %s102
    %p104 = scmp.eq.s32.totalorder %s26, 0
    %p105 = por %p103, %p104
    %p106 = scmp.le.s32.totalorder 1, %s20
    %p107 = scmp.lt.s32.totalorder %s20, 3
    %p108 = pnand %p106, %p107
    %p109 = pneg %p108
    // Predicated region
    $region9: #{elr_loss_pallas.1} parent=5 // pred_check
      _
    $region10: #{elr_loss_pallas.1} parent=5 // pred_check_branch
      %111 = sbr.rel (%p108) target = $region12
    $region11: #{elr_loss_pallas.1} parent=5 // pred_region
      %s112 = ssub.s32 %s20, 1
    $region12: #{elr_loss_pallas.1} parent=5 // pred_fallthru
      _
    %p113 = scmp.lt.s32.totalorder %s20, 2
    // Predicated region
    $region13: #{elr_loss_pallas.1} parent=5 // pred_check
      %p114 = pneg %p113
    $region14: #{elr_loss_pallas.1} parent=5 // pred_check_branch
      %116 = sbr.rel (%p114) target = $region16
    $region15: #{elr_loss_pallas.1} parent=5 // pred_region
      // Predicated region
      $region17: #{elr_loss_pallas.1} parent=15 // pred_check
        %p117 = pneg %p40
      $region18: #{elr_loss_pallas.1} parent=15 // pred_check_branch
        %119 = sbr.rel (%p117) target = $region20
      $region19: #{elr_loss_pallas.1} parent=15 // pred_region
        %p120 = scmp.lt.s32.totalorder %s20, 1
        %s121 = scalar_select %p120, %s20, 1
        %s122 = smul.addr %s121, 8
        %s123 = scalar_lea.vmem %s1, %s122
      $region20: #{elr_loss_pallas.1} parent=15 // pred_fallthru
        _
      // Predicated region
      $region21: #{elr_loss_pallas.1} parent=15 // pred_check
        %p124 = pneg %p66
      $region22: #{elr_loss_pallas.1} parent=15 // pred_check_branch
        %126 = sbr.rel (%p124) target = $region24
      $region23: #{elr_loss_pallas.1} parent=15 // pred_region
        %p127 = scmp.lt.s32.totalorder %s20, 1
        %s128 = scalar_select %p127, %s20, 1
        %s129 = smul.addr %s128, 8
        %s130 = scalar_lea.vmem %s2, %s129
      $region24: #{elr_loss_pallas.1} parent=15 // pred_fallthru
        _
    $region16: #{elr_loss_pallas.1} parent=5 // pred_fallthru
      _
    %p131 = scmp.le.s32.totalorder 1, %s20
    %p132 = scmp.lt.s32.totalorder %s20, 3
    %p133 = pnand %p131, %p132
    %p134 = pneg %p133
    // Predicated region
    $region25: #{elr_loss_pallas.1} parent=5 // pred_check
      _
    $region26: #{elr_loss_pallas.1} parent=5 // pred_check_branch
      %136 = sbr.rel (%p133) target = $region28
    $region27: #{elr_loss_pallas.1} parent=5 // pred_region
      %s137 = ssub.s32 %s20, 1
      %p138 = scmp.lt.s32.totalorder %s25, 1
      %s139 = scalar_select %p138, %s25, 1
      %s140 = smul.addr %s139, 8
      %s141 = scalar_lea.vmem %s1, %s140
      %p142 = pneg %p46
      %p143 = pneg %p43
      %p144 = scmp.lt.s32.totalorder %s25, 1
      %s145 = scalar_select %p144, %s25, 1
      %s146 = smul.addr %s145, 8
      %s147 = scalar_lea.vmem %s2, %s146
      %p148 = pneg %p72
      %p149 = pneg %p69
      %p150 = pneg %p98
      %p151 = pneg %p95
      %p152 = scmp.lt.s32.totalorder %s25, 1
      %s153 = scalar_select %p152, %s25, 1
      %s154 = smul.addr %s153, 8
      %s155 = scalar_lea.vmem %s5, %s154
      %p156 = scmp.lt.s32.totalorder %s25, 1
      %s157 = scalar_select %p156, %s25, 1
      %s158 = smul.addr %s157, 8
      %s159 = scalar_lea.vmem %s1, %s158
      %p160 = scmp.lt.s32.totalorder %s25, 1
      %s161 = scalar_select %p160, %s25, 1
      %s162 = smul.addr %s161, 8
      %s163 = scalar_lea.vmem %s2, %s162
      %p164 = scmp.lt.s32.totalorder %s25, 1
      %s165 = scalar_select %p164, %s25, 1
      %s166 = smul.addr %s165, 8
      %s167 = scalar_lea.vmem %s5, %s166
      %s168 = smul.u32 %s25, 8
      %s169 = ssub.s32 13, %s168
      %p170 = scmp.lt.s32.totalorder %s169, 8
      %s171 = scalar_select %p170, %s169, 8
      // While loop
      $region29: #{elr_loss_pallas.1} parent=27 // loop_pre_header
        _
      $region30: #{elr_loss_pallas.1} parent=27 // loop_header
        %s173 = sphi 0, %s175
        %p174 = scmp.ge.s32.totalorder %s173, %s171
      $region31: #{elr_loss_pallas.1} parent=27 // loop_header_branch
        %177 = sbr.rel (%p174) target = $region35
      $region32: #{elr_loss_pallas.1} parent=27 // loop_body
        %s178 = sadd.s32 %s168, %s173
        %s179 = sld [smem:[#allocation5 + %s178]]
        %s180 = scalar_lea.vmem %s3, %s179
        %s181 = scalar_lea.vmem [#allocation2], %s173
        // Predicated region
        $region36: #{elr_loss_pallas.1} parent=32 // pred_check
          _
        $region37: #{elr_loss_pallas.1} parent=32 // pred_check_branch
          %183 = sbr.rel target = $region39
        $region38: #{elr_loss_pallas.1} parent=32 // pred_region
          // Predicated region
          $region51: #{elr_loss_pallas.1} parent=38 // pred_check
            _
          $region52: #{elr_loss_pallas.1} parent=38 // pred_check_branch
            %199 = sbr.rel (0) target = $region54
          $region53: #{elr_loss_pallas.1} parent=38 // pred_region
            %s201 = ssub.s32 2, 1
            loop: start=0, step=1, limit=1
            $region55: #{elr_loss_pallas.1} parent=53 // loop_pre_header
              _
            $region56: #{elr_loss_pallas.1} parent=53 // loop_header
              %s203 = sphi 0, %s207
              %p204 = scmp.ge.s32.totalorder %s203, 1
              %s208 = sphi %s180, %s180
              %s209 = sphi %s181, %s181
            $region57: #{elr_loss_pallas.1} parent=53 // loop_header_branch
              %206 = sbr.rel (%p204) target = $region61
            $region58: #{elr_loss_pallas.1} parent=53 // loop_body
              %v210 = vld [vmem:[%s208] sm:%s201]
              %211 = vst [vmem:[%s209] sm:%s201] %v210
            $region59: #{elr_loss_pallas.1} parent=53 // loop_footer
              %s207 = sadd.s32 1, %s203
            $region60: #{elr_loss_pallas.1} parent=53 // loop_footer_branch
              %202 = sbr.rel target = $region56
            $region61: #{elr_loss_pallas.1} parent=53 // loop_exit
              _
          $region54: #{elr_loss_pallas.1} parent=38 // pred_fallthru
            _
        $region39: #{elr_loss_pallas.1} parent=32 // pred_fallthru
          _
        // Predicated region
        $region40: #{elr_loss_pallas.1} parent=32 // pred_check
          _
        $region41: #{elr_loss_pallas.1} parent=32 // pred_check_branch
          %185 = sbr.rel (0) target = $region43
        $region42: #{elr_loss_pallas.1} parent=32 // pred_region
          %s187 = ssub.s32 2, 1
          loop: start=0, step=1, limit=1
          $region44: #{elr_loss_pallas.1} parent=42 // loop_pre_header
            _
          $region45: #{elr_loss_pallas.1} parent=42 // loop_header
            %s189 = sphi 0, %s193
            %p190 = scmp.ge.s32.totalorder %s189, 1
            %s194 = sphi %s180, %s180
            %s195 = sphi %s181, %s181
          $region46: #{elr_loss_pallas.1} parent=42 // loop_header_branch
            %192 = sbr.rel (%p190) target = $region50
          $region47: #{elr_loss_pallas.1} parent=42 // loop_body
            %v196 = vld [vmem:[%s194] sm:%s187]
            %197 = vst [vmem:[%s195] sm:%s187] %v196
          $region48: #{elr_loss_pallas.1} parent=42 // loop_footer
            %s193 = sadd.s32 1, %s189
          $region49: #{elr_loss_pallas.1} parent=42 // loop_footer_branch
            %188 = sbr.rel target = $region45
          $region50: #{elr_loss_pallas.1} parent=42 // loop_exit
            _
        $region43: #{elr_loss_pallas.1} parent=32 // pred_fallthru
          _
        // Predicated region
        $region62: #{elr_loss_pallas.1} parent=32 // pred_check
          _
        $region63: #{elr_loss_pallas.1} parent=32 // pred_check_branch
          %214 = sbr.rel (0) target = $region65
        $region64: #{elr_loss_pallas.1} parent=32 // pred_region
          %215 = vsyncadd [#allocation3], 16
        $region65: #{elr_loss_pallas.1} parent=32 // pred_fallthru
          _
      $region33: #{elr_loss_pallas.1} parent=27 // loop_footer
        %s175 = sadd.s32 %s173, 1
      $region34: #{elr_loss_pallas.1} parent=27 // loop_footer_branch
        %172 = sbr.rel target = $region30
      $region35: #{elr_loss_pallas.1} parent=27 // loop_exit
        _
      %v216 = vld [vmem:[%s163] sm:$0xff]
      %vm217 = vcmask 80896
      %v218 = vsel %vm217, %v216, -inf
      %219 = vmax.xlane.f32.xlu0 %v218
      %v220 = vpop.xlane.xlu0 %219
      %v221 = vsub.f32 %v216, %v220
      %v222 = vmul.f32 %v221, 1.442695
      %v223 = vpow.pop %v222
      %v224 = vsel %vm217, %v223, 0.0
      %225 = vadd.xlane.f32.xlu0 %v224
      %v226 = vpop.xlane.xlu0 %225
      %v227 = vrcp.pop %v226
      %v228 = vmul.f32 %v226, %v227
      %v229 = vsub.f32 1.0, %v228
      %v230 = vmul.f32 %v227, %v229
      %v231 = vadd.f32 %v227, %v230
      %vm232 = vweird.f32 %v226
      %vm233 = vweird.f32 %v227
      %vm234 = vmor %vm232, %vm233
      %v235 = vsel %vm234, %v227, %v231
      %v236 = vand.u32 2147483647, %v226
      %vm237 = vcmp.eq.f32.partialorder %v236, 8.507059e+37
      %v238 = vand.u32 %v226, 2147483648
      %v239 = vor.u32 1.1754944e-38, %v238
      %v240 = vsel %vm237, %v239, %v235
      %v241 = vmul.f32 %v223, %v240
      %v242 = vmax.f32 %v241, 0.0001
      %v243 = vmin.f32 %v242, 0.9999
      %v244 = vsel %vm217, %v243, 0.0
      %245 = vadd.xlane.f32.xlu0 %v244
      %v246 = vpop.xlane.xlu0 %245
      %v247 = vrcp.pop %v246
      %v248 = vmul.f32 %v246, %v247
      %v249 = vsub.f32 1.0, %v248
      %v250 = vmul.f32 %v247, %v249
      %v251 = vadd.f32 %v247, %v250
      %vm252 = vweird.f32 %v246
      %vm253 = vweird.f32 %v247
      %vm254 = vmor %vm252, %vm253
      %v255 = vsel %vm254, %v247, %v251
      %v256 = vand.u32 2147483647, %v246
      %vm257 = vcmp.eq.f32.partialorder %v256, 8.507059e+37
      %v258 = vand.u32 %v246, 2147483648
      %v259 = vor.u32 1.1754944e-38, %v258
      %v260 = vsel %vm257, %v259, %v255
      %v261 = vmul.f32 %v243, %v260
      %v262 = vld [vmem:[%s159] sm:$0xff]
      %v263 = vlaneseq
      %v264 = vand.u32 %v263, 127
      %v265 = vlog2.pop %v226
      %v266 = vmul.f32 %v265, 0.6931472
      %v267 = vsub.f32 %v221, %v266
      %268 = vset.pattern.permute.xlu0 0
      %269 = vperm.xlu0 %268, %v262
      %v270 = vpop.permute.xlu0 %269
      %vm271 = vcmp.eq.s32.totalorder %v264, %v270
      %v272 = vsel %vm271, %v267, 0.0
      %v273 = vsel %vm217, %v272, 0.0
      %274 = vadd.xlane.f32.xlu0 %v273
      %v275 = vpop.xlane.xlu0 %274
      %v276 = vsub.f32 0.0, %v275
      %v277 = vlaneseq
      %v278 = vshrl.u32 %v277, 7
      %v279 = vstv %s171
      %vm280 = vcmp.lt.s32.totalorder %v278, %v279
      // While loop
      $region66: #{elr_loss_pallas.1} parent=27 // loop_pre_header
        _
      $region67: #{elr_loss_pallas.1} parent=27 // loop_header
        %s282 = sphi 0, %s284
        %p283 = scmp.ge.s32.totalorder %s282, %s171
      $region68: #{elr_loss_pallas.1} parent=27 // loop_header_branch
        %286 = sbr.rel (%p283) target = $region72
      $region69: #{elr_loss_pallas.1} parent=27 // loop_body
        %s287 = smul.u32 1, 1
        %s288 = sshll.u32 %s287, 4
        %289 = dma.done [#allocation3], %s288
      $region70: #{elr_loss_pallas.1} parent=27 // loop_footer
        %s284 = sadd.s32 %s282, 1
      $region71: #{elr_loss_pallas.1} parent=27 // loop_footer_branch
        %281 = sbr.rel target = $region67
      $region72: #{elr_loss_pallas.1} parent=27 // loop_exit
        _
      %v290 = vld [vmem:[#allocation2] sm:$0xff]
      %v291 = vsel %vm280, 1, 0
      %vm292 = vcmp.eq.s32.totalorder %v291, 1
      %v293 = vsel %vm292, %v290, 0.0
      %v294 = vmul.f32 %v293, 0.7
      %v295 = vmul.f32 %v261, 0.3
      %v296 = vadd.f32 %v294, %v295
      %297 = vst.msk [vmem:[#allocation2] sm:$0xff] %vm217, %v296
      // While loop
      $region73: #{elr_loss_pallas.1} parent=27 // loop_pre_header
        _
      $region74: #{elr_loss_pallas.1} parent=27 // loop_header
        %s299 = sphi 0, %s301
        %p300 = scmp.ge.s32.totalorder %s299, %s171
      $region75: #{elr_loss_pallas.1} parent=27 // loop_header_branch
        %303 = sbr.rel (%p300) target = $region79
      $region76: #{elr_loss_pallas.1} parent=27 // loop_body
        %s304 = sadd.s32 %s168, %s299
        %s305 = sld [smem:[#allocation5 + %s304]]
        %s306 = scalar_lea.vmem [#allocation2], %s299
        %s307 = scalar_lea.vmem %s4, %s305
        %s308 = scalar_lea.sflag [#allocation3], 1
        // Predicated region
        $region80: #{elr_loss_pallas.1} parent=76 // pred_check
          _
        $region81: #{elr_loss_pallas.1} parent=76 // pred_check_branch
          %310 = sbr.rel target = $region83
        $region82: #{elr_loss_pallas.1} parent=76 // pred_region
          // Predicated region
          $region95: #{elr_loss_pallas.1} parent=82 // pred_check
            _
          $region96: #{elr_loss_pallas.1} parent=82 // pred_check_branch
            %326 = sbr.rel (0) target = $region98
          $region97: #{elr_loss_pallas.1} parent=82 // pred_region
            %s328 = ssub.s32 2, 1
            loop: start=0, step=1, limit=1
            $region99: #{elr_loss_pallas.1} parent=97 // loop_pre_header
              _
            $region100: #{elr_loss_pallas.1} parent=97 // loop_header
              %s330 = sphi 0, %s334
              %p331 = scmp.ge.s32.totalorder %s330, 1
              %s335 = sphi %s306, %s306
              %s336 = sphi %s307, %s307
            $region101: #{elr_loss_pallas.1} parent=97 // loop_header_branch
              %333 = sbr.rel (%p331) target = $region105
            $region102: #{elr_loss_pallas.1} parent=97 // loop_body
              %v337 = vld [vmem:[%s335] sm:%s328]
              %338 = vst [vmem:[%s336] sm:%s328] %v337
            $region103: #{elr_loss_pallas.1} parent=97 // loop_footer
              %s334 = sadd.s32 1, %s330
            $region104: #{elr_loss_pallas.1} parent=97 // loop_footer_branch
              %329 = sbr.rel target = $region100
            $region105: #{elr_loss_pallas.1} parent=97 // loop_exit
              _
          $region98: #{elr_loss_pallas.1} parent=82 // pred_fallthru
            _
        $region83: #{elr_loss_pallas.1} parent=76 // pred_fallthru
          _
        // Predicated region
        $region84: #{elr_loss_pallas.1} parent=76 // pred_check
          _
        $region85: #{elr_loss_pallas.1} parent=76 // pred_check_branch
          %312 = sbr.rel (0) target = $region87
        $region86: #{elr_loss_pallas.1} parent=76 // pred_region
          %s314 = ssub.s32 2, 1
          loop: start=0, step=1, limit=1
          $region88: #{elr_loss_pallas.1} parent=86 // loop_pre_header
            _
          $region89: #{elr_loss_pallas.1} parent=86 // loop_header
            %s316 = sphi 0, %s320
            %p317 = scmp.ge.s32.totalorder %s316, 1
            %s321 = sphi %s306, %s306
            %s322 = sphi %s307, %s307
          $region90: #{elr_loss_pallas.1} parent=86 // loop_header_branch
            %319 = sbr.rel (%p317) target = $region94
          $region91: #{elr_loss_pallas.1} parent=86 // loop_body
            %v323 = vld [vmem:[%s321] sm:%s314]
            %324 = vst [vmem:[%s322] sm:%s314] %v323
          $region92: #{elr_loss_pallas.1} parent=86 // loop_footer
            %s320 = sadd.s32 1, %s316
          $region93: #{elr_loss_pallas.1} parent=86 // loop_footer_branch
            %315 = sbr.rel target = $region89
          $region94: #{elr_loss_pallas.1} parent=86 // loop_exit
            _
        $region87: #{elr_loss_pallas.1} parent=76 // pred_fallthru
          _
        // Predicated region
        $region106: #{elr_loss_pallas.1} parent=76 // pred_check
          _
        $region107: #{elr_loss_pallas.1} parent=76 // pred_check_branch
          %341 = sbr.rel (0) target = $region109
        $region108: #{elr_loss_pallas.1} parent=76 // pred_region
          %342 = vsyncadd %s308, 16
        $region109: #{elr_loss_pallas.1} parent=76 // pred_fallthru
          _
      $region77: #{elr_loss_pallas.1} parent=27 // loop_footer
        %s301 = sadd.s32 %s299, 1
      $region78: #{elr_loss_pallas.1} parent=27 // loop_footer_branch
        %298 = sbr.rel target = $region74
      $region79: #{elr_loss_pallas.1} parent=27 // loop_exit
        _
      %v343 = vmul.f32 %v296, %v243
      %v344 = vsel %vm217, %v343, 0.0
      %345 = vadd.xlane.f32.xlu0 %v344
      %v346 = vpop.xlane.xlu0 %345
      %v347 = vsub.f32 1.0, %v346
      %v348 = vmax.f32 %v347, 1e-08
      %v349 = vlog2.pop %v348
      %v350 = vmul.f32 %v349, 0.6931472
      %v351 = vmul.f32 %v350, 0.3
      %v352 = vadd.f32 %v276, %v351
      %v353 = vsel %vm280, %v352, 0.0
      %vm354 = vcmask 7168
      %v355 = vsel %vm354, %v353, 0.0
      %356 = vadd.xlane.f32.xlu0 %v355
      %v357 = vpop.xlane.xlu0 %356
      %v358 = vrot.slane %v357, 4
      %v359 = vadd.f32 %v357, %v358
      %v360 = vrot.slane %v359, 2
      %v361 = vadd.f32 %v359, %v360
      %v362 = vrot.slane %v361, 1
      %v363 = vadd.f32 %v361, %v362
      %s364 = vtos %v363
      %v365 = vstv %s364
      %v366 = vadd.f32 %v365, 0.0
      %367 = vst [vmem:[%s167] sm:$0xff] %v366
      // While loop
      $region110: #{elr_loss_pallas.1} parent=27 // loop_pre_header
        _
      $region111: #{elr_loss_pallas.1} parent=27 // loop_header
        %s369 = sphi 0, %s371
        %p370 = scmp.ge.s32.totalorder %s369, %s171
      $region112: #{elr_loss_pallas.1} parent=27 // loop_header_branch
        %373 = sbr.rel (%p370) target = $region116
      $region113: #{elr_loss_pallas.1} parent=27 // loop_body
        %s374 = scalar_lea.sflag [#allocation3], 1
        %s375 = smul.u32 1, 1
        %s376 = sshll.u32 %s375, 4
        %377 = dma.done %s374, %s376
      $region114: #{elr_loss_pallas.1} parent=27 // loop_footer
        %s371 = sadd.s32 %s369, 1
      $region115: #{elr_loss_pallas.1} parent=27 // loop_footer_branch
        %368 = sbr.rel target = $region111
      $region116: #{elr_loss_pallas.1} parent=27 // loop_exit
        _
      %p378 = scmp.lt.s32.totalorder %s25, 1
      %s379 = scalar_select %p378, %s25, 1
      %s380 = smul.addr %s379, 8
      %s381 = scalar_lea.vmem %s5, %s380
      // Predicated region
      $region117: #{elr_loss_pallas.1} parent=27 // pred_check
        %p382 = pneg %p95
      $region118: #{elr_loss_pallas.1} parent=27 // pred_check_branch
        %384 = sbr.rel (%p382) target = $region120
      $region119: #{elr_loss_pallas.1} parent=27 // pred_region
        _
      $region120: #{elr_loss_pallas.1} parent=27 // pred_fallthru
        _
    $region28: #{elr_loss_pallas.1} parent=5 // pred_fallthru
      _
    %p385 = scmp.le.s32.totalorder 2, %s20
    // Predicated region
    $region121: #{elr_loss_pallas.1} parent=5 // pred_check
      %p386 = pneg %p385
    $region122: #{elr_loss_pallas.1} parent=5 // pred_check_branch
      %388 = sbr.rel (%p386) target = $region124
    $region123: #{elr_loss_pallas.1} parent=5 // pred_region
      %s389 = ssub.s32 %s20, 2
      // Predicated region
      $region125: #{elr_loss_pallas.1} parent=123 // pred_check
        %p390 = pneg %p101
      $region126: #{elr_loss_pallas.1} parent=123 // pred_check_branch
        %392 = sbr.rel (%p390) target = $region128
      $region127: #{elr_loss_pallas.1} parent=123 // pred_region
        %p393 = scmp.lt.s32.totalorder %s26, 1
        %s394 = scalar_select %p393, %s26, 1
        %s395 = smul.addr %s394, 8
        %s396 = scalar_lea.vmem %s5, %s395
      $region128: #{elr_loss_pallas.1} parent=123 // pred_fallthru
        _
    $region124: #{elr_loss_pallas.1} parent=5 // pred_fallthru
      _
  $region6: #{elr_loss_pallas.1} parent=0 // loop_footer
    %s24 = sadd.s32 1, %s20
  $region7: #{elr_loss_pallas.1} parent=0 // loop_footer_branch
    %19 = sbr.rel target = $region3
  $region8: #{elr_loss_pallas.1} parent=0 // loop_exit
    _
  %397 = vsyncmov [#allocation3]
  %s398 = vpop.sfrf %397
  %p399 = scmp.eq.s32.totalorder %s398, 0
  %p400 = pneg %p399
  %402 = shalt.err (%p400)
  %s403 = scalar_lea.sflag [#allocation3], 1
  %404 = vsyncmov %s403
  %s405 = vpop.sfrf %404
  %p406 = scmp.eq.s32.totalorder %s405, 0
  %p407 = pneg %p406
  %409 = shalt.err (%p407)

</llo_original>
